<compile_context>
chip_gen: v6e
topology: v6e:2x2x1
jax: 0.10.0
libtpu: 0.0.40
codegen_flags: <defaults>
</compile_context>

<pallas_src>
import jax
import jax.numpy as jnp
import numpy as np
from jax import lax
from jax.experimental import pallas as pl
from jax.experimental.pallas import tpu as pltpu

# "config" sizes (synthetic, consistent with m_sql_fy label sets)
HIDDEN = 32            # bert_config.hidden_size (small for the example)
N_S_NUM = 4            # len(config.S_num_labels)
N_W_NUM_OP = 8         # len(config.W_num_op_labels)
N_W_COL_VAL = 5        # len(config.W_col_val_labels)

# Packed (lane-dense) head layout: [S_num | W_num_op | W_col_val | zero pad]
C_PAD = 128
S_OFF = 0
WN_OFF = S_OFF + N_S_NUM          # 4
WCV_OFF = WN_OFF + N_W_NUM_OP     # 12  (total used = 17 <= 128)

LN_EPS = 1e-12
ROW_ALIGN = 16                     # bf16 sublane packing: native tile [16, 128]


def _round_up(x, m):
    return (x + m - 1) // m * m


def _msql_kernel(x_ref, m_ref, w_ref, b_ref, y_ref):
    """Fused: bf16 load -> f32 LayerNorm -> attn-mask -> bf16 MXU matmul
    against the packed [H,128] head weight -> f32 bias -> question-mask select
    restricted to the W_col_val column range -> bf16 lane-dense output slab."""
    h = x_ref[...].astype(jnp.float32)                     # [TM, H], LN in f32

    # Surrogate-encoder epilogue: LayerNorm over H, then zero padded positions
    # with the attention mask (same semantics as the JAX surrogate).
    mu = jnp.mean(h, axis=-1, keepdims=True)
    xc = h - mu
    var = jnp.mean(xc * xc, axis=-1, keepdims=True)
    h = xc * lax.rsqrt(var + LN_EPS)                       # EUP rsqrt (free slot)

    am = m_ref[:, 0:1]                                     # [TM, 1] f32 attention mask
    qm = m_ref[:, 1:2]                                     # [TM, 1] f32 question mask
    h = h * am                                             # 32 lanes/row here
    # TODO(synk): at real BERT H (e.g. 768) apply `am` to the 128-lane dot
    #             result instead (y = am*dot + b) to cut the broadcast-mul cost.

    # Single lane-dense bf16 matmul for all three heads; f32 accumulation.
    y = jnp.dot(h.astype(jnp.bfloat16), w_ref[...],
                preferred_element_type=jnp.float32) + b_ref[...]

    # torch.where(question_mask == 1, out, question_mask), applied only to the
    # W_col_val column range of the packed slab (S_num / W_num_op untouched).
    # Collapsed into a single vselect per vreg.
    col = lax.broadcasted_iota(jnp.int32, (1, C_PAD), 1)
    in_wcv = (col >= WCV_OFF) & (col < WCV_OFF + N_W_COL_VAL)
    y = jnp.where(in_wcv & (qm != 1.0), qm, y)
    y_ref[...] = y.astype(y_ref.dtype)                     # bf16 unmasked vst slab


def pack_head_params(params):
    """Pack the 3 head weights/biases into one zero-padded, lane-dense
    [H, 128] bf16 weight and one [1, 128] f32 bias row.  Called ONCE at init
    (hoisted out of the forward pass)."""
    ws, bs, wn, bn, wcv, bcv = params
    w = jnp.zeros((HIDDEN, C_PAD), jnp.float32)
    w = w.at[:, S_OFF:S_OFF + N_S_NUM].set(ws)
    w = w.at[:, WN_OFF:WN_OFF + N_W_NUM_OP].set(wn)
    w = w.at[:, WCV_OFF:WCV_OFF + N_W_COL_VAL].set(wcv)
    b = jnp.zeros((1, C_PAD), jnp.float32)
    b = b.at[:, S_OFF:S_OFF + N_S_NUM].set(bs)
    b = b.at[:, WN_OFF:WN_OFF + N_W_NUM_OP].set(bn)
    b = b.at[:, WCV_OFF:WCV_OFF + N_W_COL_VAL].set(bcv)
    return w.astype(jnp.bfloat16), b


def msql_heads(h_embed, attention_masks, question_masks, packed_params, *,
               row_tile=2048):
    """Fused LayerNorm + 3-head projection + question masking, one pallas_call.

    h_embed: [B, S, H] pre-LayerNorm embeddings (surrogate encoder body).
    Returns (S_num [B, 4], W_num_op [B, 8], W_col_val [B, S, 5]) in f32.
    """
    B, S, H = h_embed.shape
    w_packed, b_packed = packed_params
    BS = B * S

    # bf16 hidden states: halves the dominant [BS, H] HBM read. Masks stay f32
    # (exact 0/1) and are merged into one [BS, 2] stream.
    x = h_embed.reshape(BS, H).astype(jnp.bfloat16)
    masks = jnp.concatenate(
        [attention_masks.reshape(BS, 1).astype(jnp.float32),
         question_masks.reshape(BS, 1).astype(jnp.float32)], axis=-1)   # [BS, 2]

    # Row tile: large (amortizes ~0.35us/step), but capped at ceil(BS/2) so the
    # "parallel" grid has >= 2 steps whenever possible (v7x megacore), aligned
    # to the bf16 sublane tile.
    tm = min(row_tile, _round_up((BS + 1) // 2, ROW_ALIGN))
    tm = max(tm, ROW_ALIGN)
    bs_pad = _round_up(BS, tm)
    if bs_pad != BS:
        pad = bs_pad - BS
        x = jnp.pad(x, ((0, pad), (0, 0)))
        masks = jnp.pad(masks, ((0, pad), (0, 0)))

    packed_out = pl.pallas_call(
        _msql_kernel,
        out_shape=jax.ShapeDtypeStruct((bs_pad, C_PAD), jnp.bfloat16),
        grid=(bs_pad // tm,),
        in_specs=[
            pl.BlockSpec((tm, H), lambda i: (i, 0)),        # bf16 embeddings
            pl.BlockSpec((tm, 2), lambda i: (i, 0)),        # [attn | question] masks
            pl.BlockSpec((H, C_PAD), lambda i: (0, 0)),     # packed bf16 weights (const)
            pl.BlockSpec((1, C_PAD), lambda i: (0, 0)),     # packed f32 bias (const)
        ],
        out_specs=pl.BlockSpec((tm, C_PAD), lambda i: (i, 0)),
        compiler_params=pltpu.CompilerParams(
            dimension_semantics=("parallel",)),
        # NOTE: ~1 MiB/step even at tm=2048 with bf16 in/out, so no
        # vmem_limit_bytes needed; set it when scaling to real BERT H on v5e
        # (16 MiB default scoped limit).
    )(x, masks, w_packed, b_packed)

    # Un-pad + slice the packed bf16 slab back into the three logical outputs.
    y = packed_out[:BS].astype(jnp.float32).reshape(B, S, C_PAD)
    s_num = y[:, 0, S_OFF:S_OFF + N_S_NUM]                     # [B, 4]
    w_num_op = y[:, 0, WN_OFF:WN_OFF + N_W_NUM_OP]             # [B, 8]
    w_col_val = y[:, :, WCV_OFF:WCV_OFF + N_W_COL_VAL]         # [B, S, 5]
    return s_num, w_num_op, w_col_val


# ----------------------------------------------------------------------------
# Glue: deterministic "encoder" surrogate + parameter init
# ----------------------------------------------------------------------------

def init_params(key):
    """nn.Linear-style init (uniform +-1/sqrt(fan_in)); biases kept 2D [1, C]."""
    ks = jax.random.split(key, 6)
    bound = 1.0 / np.sqrt(HIDDEN)
    u = lambda k, shape: jax.random.uniform(k, shape, jnp.float32, -bound, bound)
    ws = u(ks[0], (HIDDEN, N_S_NUM));      bs = u(ks[1], (1, N_S_NUM))
    wn = u(ks[2], (HIDDEN, N_W_NUM_OP));   bn = u(ks[3], (1, N_W_NUM_OP))
    wcv = u(ks[4], (HIDDEN, N_W_COL_VAL)); bcv = u(ks[5], (1, N_W_COL_VAL))
    return ws, bs, wn, bn, wcv, bcv


def surrogate_embeddings(key, token_ids, token_type_ids, vocab=64, max_pos=64):
    """Deterministic stand-in for the BertModel embedding sum (plain JAX glue).
    The LayerNorm + attention-mask multiply are fused into the Pallas kernel."""
    k1, k2, k3 = jax.random.split(key, 3)
    tok_emb = jax.random.normal(k1, (vocab, HIDDEN), jnp.float32) * 0.02
    typ_emb = jax.random.normal(k2, (2, HIDDEN), jnp.float32) * 0.02
    pos_emb = jax.random.normal(k3, (max_pos, HIDDEN), jnp.float32) * 0.02
    B, S = token_ids.shape
    pos = jnp.arange(S)
    return tok_emb[token_ids] + typ_emb[token_type_ids] + pos_emb[pos][None, :, :]


def msql_forward(token_ids, token_type_ids, attention_masks,
                 SEP_ids, SEP_masks, question_masks, packed_params, enc_key):
    # SEP_ids / SEP_masks are unused in the PyTorch forward as well.
    h_embed = surrogate_embeddings(enc_key, token_ids, token_type_ids)
    s_num, w_num_op, w_col_val = msql_heads(
        h_embed, attention_masks, question_masks.astype(jnp.float32),
        packed_params)
    return {"S_num": s_num, "W_num_op": w_num_op, "W_col_val": w_col_val}


if __name__ == "__main__":
    B, S = 2, 16
    root = jax.random.PRNGKey(0)
    k_param, k_enc, k_tok = jax.random.split(root, 3)

    token_ids = jax.random.randint(k_tok, (B, S), 0, 64, dtype=jnp.int32)
    token_type_ids = jnp.concatenate(
        [jnp.zeros((B, S // 2), jnp.int32), jnp.ones((B, S // 2), jnp.int32)], axis=1)
    attention_masks = jnp.ones((B, S), jnp.int32)
    SEP_ids = jnp.full((B, 2), S - 1, jnp.int32)       # unused in forward
    SEP_masks = jnp.ones((B, 2), jnp.int32)            # unused in forward
    # question tokens occupy positions 1..S//2-1 (CLS and second segment masked out)
    question_masks = jnp.zeros((B, S), jnp.float32).at[:, 1:S // 2].set(1.0)

    params = init_params(k_param)
    packed_params = pack_head_params(params)   # hoisted: packed once, reused

    out = msql_forward(token_ids, token_type_ids, attention_masks,
                       SEP_ids, SEP_masks, question_masks, packed_params, k_enc)
    jax.block_until_ready(out)

    # ------------- Pure-JAX reference (mimics the in-kernel bf16 path) -------
    h_raw = surrogate_embeddings(k_enc, token_ids, token_type_ids)
    h_bf = h_raw.astype(jnp.bfloat16).astype(jnp.float32)      # kernel loads bf16
    mu = jnp.mean(h_bf, axis=-1, keepdims=True)
    xc = h_bf - mu
    var = jnp.mean(xc * xc, axis=-1, keepdims=True)
    h_ref = xc * lax.rsqrt(var + LN_EPS)
    h_ref = h_ref * attention_masks[:, :, None].astype(jnp.float32)
    hb = h_ref.astype(jnp.bfloat16)

    ws, bs_, wn, bn, wcv, bcv = params
    h_cls = hb[:, 0, :]
    ref_s = jnp.dot(h_cls, ws.astype(jnp.bfloat16),
                    preferred_element_type=jnp.float32) + bs_
    ref_wn = jnp.dot(h_cls, wn.astype(jnp.bfloat16),
                     preferred_element_type=jnp.float32) + bn
    ref_cv = jnp.einsum("bsh,hc->bsc", hb, wcv.astype(jnp.bfloat16),
                        preferred_element_type=jnp.float32) + bcv[None, :, :]
    qm3 = jnp.broadcast_to(question_masks[:, :, None], ref_cv.shape)
    ref_cv = jnp.where(qm3 == 1.0, ref_cv, qm3)
    # match the kernel's bf16 output-slab round trip
    ref_s = ref_s.astype(jnp.bfloat16).astype(jnp.float32)
    ref_wn = ref_wn.astype(jnp.bfloat16).astype(jnp.float32)
    ref_cv = ref_cv.astype(jnp.bfloat16).astype(jnp.float32)

    tol = dict(atol=2e-2, rtol=2e-2)
    assert np.allclose(np.asarray(out["S_num"]), np.asarray(ref_s), **tol)
    assert np.allclose(np.asarray(out["W_num_op"]), np.asarray(ref_wn), **tol)
    assert np.allclose(np.asarray(out["W_col_val"]), np.asarray(ref_cv), **tol)

    print("KERNEL_OK")
</pallas_src>

<mosaic_0001>
module attributes {stable_mosaic.version = 11 : i64} {
  func.func @_msql_kernel(%arg0: i32, %arg1: memref<16x32xbf16, #tpu.memory_space<vmem>>, %arg2: memref<16x2xf32, #tpu.memory_space<vmem>>, %arg3: memref<32x128xbf16, #tpu.memory_space<vmem>>, %arg4: memref<1x128xf32, #tpu.memory_space<vmem>>, %arg5: memref<16x128xbf16, #tpu.memory_space<vmem>>) attributes {dimension_semantics = [#tpu.dimension_semantics<parallel>], iteration_bounds = array<i64: 2>, scalar_prefetch = 0 : i64, scratch_operands = 0 : i64, tpu.core_type = #tpu.core_type<tc>, window_params = [{transform_indices = @transform_0, window_bounds = array<i64: 16, 32>}, {transform_indices = @transform_1, window_bounds = array<i64: 16, 2>}, {pipeline_mode = #tpu.pipeline_mode<synchronous>, transform_indices = @transform_2, window_bounds = array<i64: 32, 128>}, {pipeline_mode = #tpu.pipeline_mode<synchronous>, transform_indices = @transform_3, window_bounds = array<i64: 1, 128>}, {transform_indices = @transform_4, window_bounds = array<i64: 16, 128>}]} {
    %c0 = arith.constant 0 : index
    %c0_0 = arith.constant 0 : index
    %0 = vector.load %arg1[%c0, %c0_0] : memref<16x32xbf16, #tpu.memory_space<vmem>>, vector<16x32xbf16>
    %1 = arith.extf %0 : vector<16x32xbf16> to vector<16x32xf32>
    %cst = arith.constant dense<0.000000e+00> : vector<16xf32>
    %2 = vector.multi_reduction <add>, %1, %cst [1] : vector<16x32xf32> to vector<16xf32>
    %3 = vector.shape_cast %2 : vector<16xf32> to vector<16x1xf32>
    %cst_1 = arith.constant 3.200000e+01 : f32
    %4 = vector.broadcast %cst_1 : f32 to vector<16x1xf32>
    %5 = arith.divf %3, %4 : vector<16x1xf32>
    %6 = vector.broadcast %5 : vector<16x1xf32> to vector<16x32xf32>
    %7 = arith.subf %1, %6 : vector<16x32xf32>
    %8 = arith.mulf %7, %7 : vector<16x32xf32>
    %cst_2 = arith.constant dense<0.000000e+00> : vector<16xf32>
    %9 = vector.multi_reduction <add>, %8, %cst_2 [1] : vector<16x32xf32> to vector<16xf32>
    %10 = vector.shape_cast %9 : vector<16xf32> to vector<16x1xf32>
    %cst_3 = arith.constant 3.200000e+01 : f32
    %11 = vector.broadcast %cst_3 : f32 to vector<16x1xf32>
    %12 = arith.divf %10, %11 : vector<16x1xf32>
    %cst_4 = arith.constant 9.99999996E-13 : f32
    %13 = vector.broadcast %cst_4 : f32 to vector<16x1xf32>
    %14 = arith.addf %12, %13 : vector<16x1xf32>
    %15 = math.rsqrt %14 : vector<16x1xf32>
    %16 = vector.broadcast %15 : vector<16x1xf32> to vector<16x32xf32>
    %17 = arith.mulf %7, %16 : vector<16x32xf32>
    %c0_5 = arith.constant 0 : index
    %c0_6 = arith.constant 0 : index
    %18 = vector.load %arg2[%c0_5, %c0_6] : memref<16x2xf32, #tpu.memory_space<vmem>>, vector<16x1xf32>
    %c0_7 = arith.constant 0 : index
    %c1 = arith.constant 1 : index
    %19 = vector.load %arg2[%c0_7, %c1] : memref<16x2xf32, #tpu.memory_space<vmem>>, vector<16x1xf32>
    %20 = vector.broadcast %18 : vector<16x1xf32> to vector<16x32xf32>
    %21 = arith.mulf %17, %20 : vector<16x32xf32>
    %22 = arith.truncf %21 : vector<16x32xf32> to vector<16x32xbf16>
    %c0_8 = arith.constant 0 : index
    %c0_9 = arith.constant 0 : index
    %23 = vector.load %arg3[%c0_8, %c0_9] : memref<32x128xbf16, #tpu.memory_space<vmem>>, vector<32x128xbf16>
    %cst_10 = arith.constant dense<0.000000e+00> : vector<16x128xf32>
    %24 = tpu.matmul %22, %23, %cst_10 {dimension_numbers = #tpu.dot_dimension_numbers<[1], [0], [0], [1], [0, 0, 1, 1], [], []>} : vector<16x32xbf16>, vector<32x128xbf16>, vector<16x128xf32> -> vector<16x128xf32>
    %c0_11 = arith.constant 0 : index
    %c0_12 = arith.constant 0 : index
    %25 = vector.load %arg4[%c0_11, %c0_12] : memref<1x128xf32, #tpu.memory_space<vmem>>, vector<1x128xf32>
    %26 = vector.broadcast %25 : vector<1x128xf32> to vector<16x128xf32>
    %27 = arith.addf %24, %26 : vector<16x128xf32>
    %28 = tpu.iota {dimensions = array<i32: 1>} : vector<1x128xi32>
    %c12_i32 = arith.constant 12 : i32
    %29 = vector.broadcast %c12_i32 : i32 to vector<1x128xi32>
    %30 = arith.cmpi sge, %28, %29 : vector<1x128xi32>
    %c17_i32 = arith.constant 17 : i32
    %31 = vector.broadcast %c17_i32 : i32 to vector<1x128xi32>
    %32 = arith.cmpi slt, %28, %31 : vector<1x128xi32>
    %33 = arith.andi %30, %32 : vector<1x128xi1>
    %cst_13 = arith.constant 1.000000e+00 : f32
    %34 = vector.broadcast %cst_13 : f32 to vector<16x1xf32>
    %35 = arith.cmpf one, %19, %34 : vector<16x1xf32>
    %36 = vector.broadcast %33 : vector<1x128xi1> to vector<16x128xi1>
    %37 = vector.broadcast %35 : vector<16x1xi1> to vector<16x128xi1>
    %38 = arith.andi %36, %37 : vector<16x128xi1>
    %39 = vector.shape_cast %19 : vector<16x1xf32> to vector<16x1xf32>
    %40 = vector.broadcast %39 : vector<16x1xf32> to vector<16x128xf32>
    %41 = arith.select %38, %40, %27 : vector<16x128xi1>, vector<16x128xf32>
    %42 = arith.truncf %41 : vector<16x128xf32> to vector<16x128xbf16>
    %c0_14 = arith.constant 0 : index
    %c0_15 = arith.constant 0 : index
    %43 = vector.load %arg5[%c0_14, %c0_15] : memref<16x128xbf16, #tpu.memory_space<vmem>>, vector<16x128xbf16>
    tpu.vector_store %arg5[%c0_14, %c0_15], %42 {strides = array<i32>} : memref<16x128xbf16, #tpu.memory_space<vmem>>, vector<16x128xbf16>,
    return
  }
  func.func @transform_0(%arg0: i32) -> (i32, i32) {
    %c0_i32 = arith.constant 0 : i32
    %c0_i32_0 = arith.constant 0 : i32
    return %arg0, %c0_i32 : i32, i32
  }
  func.func @transform_1(%arg0: i32) -> (i32, i32) {
    %c0_i32 = arith.constant 0 : i32
    %c0_i32_0 = arith.constant 0 : i32
    return %arg0, %c0_i32 : i32, i32
  }
  func.func @transform_2(%arg0: i32) -> (i32, i32) {
    %c0_i32 = arith.constant 0 : i32
    %c0_i32_0 = arith.constant 0 : i32
    %c0_i32_1 = arith.constant 0 : i32
    return %c0_i32, %c0_i32_0 : i32, i32
  }
  func.func @transform_3(%arg0: i32) -> (i32, i32) {
    %c0_i32 = arith.constant 0 : i32
    %c0_i32_0 = arith.constant 0 : i32
    %c0_i32_1 = arith.constant 0 : i32
    return %c0_i32, %c0_i32_0 : i32, i32
  }
  func.func @transform_4(%arg0: i32) -> (i32, i32) {
    %c0_i32 = arith.constant 0 : i32
    %c0_i32_0 = arith.constant 0 : i32
    return %arg0, %c0_i32 : i32, i32
  }
}

</mosaic_0001>

<llo_original>
// kernel: tpu_custom_call.1
$region0: #{tpu_custom_call.1}
  #allocation0 [shape = 'u32[]', space=smem, size = 0x4, offset = 0x4, fixed_abs, tag = 'smem constant byte address 0x4 - core index']
  #allocation1 [shape = 'u32[144,128]{1,0:T(1,128)}', space=vmem, size = 0x12000, scoped, tag = 'internal scratch']
  %s0 = inlined_call_operand.vmem [shape: bf16[32,32], index: 0, kind: input, shape index: {}]
  %s1 = inlined_call_operand.vmem [shape: f32[32,2], index: 1, kind: input, shape index: {}]
  %s2 = inlined_call_operand.vmem [shape: bf16[32,128], index: 2, kind: input, shape index: {}]
  %s3 = inlined_call_operand.vmem [shape: f32[1,128], index: 3, kind: input, shape index: {}]
  %s4 = inlined_call_operand.hbm [shape: bf16[32,128], index: 4, kind: output, shape index: {}]
  %s5 = sld [smem:[#allocation0]]
  $region49: #{tpu_custom_call.1} parent=0
    _
  %s7 = ssub.s32 1, %s5
  %s8 = scalar_select 0, %s7, %s5
  $region1: #{tpu_custom_call.1} parent=0
    #allocation2 [shape = 'u8[8192]{0}', space=vmem, size = 0x2000, scoped, tag = 'output window, operand 0']
    #allocation3 [shape = 's32[2]{0}', space=sflag, size = 0x8, scoped, tag = 'scoped memory for tpu_custom_call.1']
    %9 = vsyncpa [#allocation3], 0
    %s10 = scalar_lea.sflag [#allocation3], 1
    %11 = vsyncpa %s10, 0
    loop: start=0, step=1, limit=4
    $region2: #{tpu_custom_call.1} parent=1 // loop_pre_header
      _
    $region3: #{tpu_custom_call.1} parent=1 // loop_header
      %s13 = sphi 0, %s17
      %p14 = scmp.ge.s32.totalorder %s13, 4
      %s23 = sphi 0, %s25
      %s26 = sphi 0, %s23
      %s27 = sphi 0, %s26
      %s43 = sphi 0, %s27
      %s49 = sphi 0, %s51
      %s52 = sphi 0, %s49
      %s53 = sphi 0, %s52
      %s69 = sphi 0, %s53
      %s73 = sphi 0, %s73
      %s75 = sphi 0, %s73
      %s76 = sphi 0, %s75
      %s90 = sphi 0, %s76
      %s94 = sphi 0, %s94
      %s96 = sphi 0, %s94
      %s97 = sphi 0, %s96
      %s111 = sphi 0, %s97
      %s117 = sphi 0, %s119
      %s120 = sphi 0, %s117
      %s121 = sphi 0, %s120
      %s137 = sphi 0, %s121
    $region4: #{tpu_custom_call.1} parent=1 // loop_header_branch
      %16 = sbr.rel (%p14) target = $region8
    $region5: #{tpu_custom_call.1} parent=1 // loop_body
      %s18 = ssub.s32 %s13, 1
      %s19 = ssub.s32 %s13, 2
      %s20 = sadd.s32 %s13, 1
      %s21 = ssub.s32 %s13, %s20
      %p22 = scmp.eq.s32.totalorder %s21, 0
      %s24 = sadd.s32 %s23, 1
      %s25 = scalar_select %p22, %s23, %s24
      %p28 = pneg %p22
      %p29 = scmp.eq.s32.totalorder %s13, 1
      %p30 = por %p28, %p29
      %p31 = scmp.ne.s32.totalorder %s23, %s26
      %p32 = scmp.eq.s32.totalorder %s13, 0
      %p33 = por %p31, %p32
      %p34 = scmp.ne.s32.totalorder %s23, %s26
      %p35 = scmp.eq.s32.totalorder %s18, 1
      %p36 = por %p34, %p35
      %p37 = scmp.ne.s32.totalorder %s26, %s27
      %p38 = scmp.eq.s32.totalorder %s18, 0
      %p39 = por %p37, %p38
      %p40 = scmp.ne.s32.totalorder %s26, %s27
      %p41 = scmp.eq.s32.totalorder %s19, 1
      %p42 = por %p40, %p41
      %p44 = scmp.ne.s32.totalorder %s27, %s43
      %p45 = scmp.eq.s32.totalorder %s19, 0
      %p46 = por %p44, %p45
      %s47 = ssub.s32 %s13, %s20
      %p48 = scmp.eq.s32.totalorder %s47, 0
      %s50 = sadd.s32 %s49, 1
      %s51 = scalar_select %p48, %s49, %s50
      %p54 = pneg %p48
      %p55 = scmp.eq.s32.totalorder %s13, 1
      %p56 = por %p54, %p55
      %p57 = scmp.ne.s32.totalorder %s49, %s52
      %p58 = scmp.eq.s32.totalorder %s13, 0
      %p59 = por %p57, %p58
      %p60 = scmp.ne.s32.totalorder %s49, %s52
      %p61 = scmp.eq.s32.totalorder %s18, 1
      %p62 = por %p60, %p61
      %p63 = scmp.ne.s32.totalorder %s52, %s53
      %p64 = scmp.eq.s32.totalorder %s18, 0
      %p65 = por %p63, %p64
      %p66 = scmp.ne.s32.totalorder %s52, %s53
      %p67 = scmp.eq.s32.totalorder %s19, 1
      %p68 = por %p66, %p67
      %p70 = scmp.ne.s32.totalorder %s53, %s69
      %p71 = scmp.eq.s32.totalorder %s19, 0
      %p72 = por %p70, %p71
      %s74 = sadd.s32 %s73, 1
      %p77 = scmp.eq.s32.totalorder %s13, 1
      %p78 = scmp.ne.s32.totalorder %s73, %s75
      %p79 = scmp.eq.s32.totalorder %s13, 0
      %p80 = por %p78, %p79
      %p81 = scmp.ne.s32.totalorder %s73, %s75
      %p82 = scmp.eq.s32.totalorder %s18, 1
      %p83 = por %p81, %p82
      %p84 = scmp.ne.s32.totalorder %s75, %s76
      %p85 = scmp.eq.s32.totalorder %s18, 0
      %p86 = por %p84, %p85
      %p87 = scmp.ne.s32.totalorder %s75, %s76
      %p88 = scmp.eq.s32.totalorder %s19, 1
      %p89 = por %p87, %p88
      %p91 = scmp.ne.s32.totalorder %s76, %s90
      %p92 = scmp.eq.s32.totalorder %s19, 0
      %p93 = por %p91, %p92
      %s95 = sadd.s32 %s94, 1
      %p98 = scmp.eq.s32.totalorder %s13, 1
      %p99 = scmp.ne.s32.totalorder %s94, %s96
      %p100 = scmp.eq.s32.totalorder %s13, 0
      %p101 = por %p99, %p100
      %p102 = scmp.ne.s32.totalorder %s94, %s96
      %p103 = scmp.eq.s32.totalorder %s18, 1
      %p104 = por %p102, %p103
      %p105 = scmp.ne.s32.totalorder %s96, %s97
      %p106 = scmp.eq.s32.totalorder %s18, 0
      %p107 = por %p105, %p106
      %p108 = scmp.ne.s32.totalorder %s96, %s97
      %p109 = scmp.eq.s32.totalorder %s19, 1
      %p110 = por %p108, %p109
      %p112 = scmp.ne.s32.totalorder %s97, %s111
      %p113 = scmp.eq.s32.totalorder %s19, 0
      %p114 = por %p112, %p113
      %s115 = ssub.s32 %s13, %s20
      %p116 = scmp.eq.s32.totalorder %s115, 0
      %s118 = sadd.s32 %s117, 1
      %s119 = scalar_select %p116, %s117, %s118
      %p122 = pneg %p116
      %p123 = scmp.eq.s32.totalorder %s13, 1
      %p124 = por %p122, %p123
      %p125 = scmp.ne.s32.totalorder %s117, %s120
      %p126 = scmp.eq.s32.totalorder %s13, 0
      %p127 = por %p125, %p126
      %p128 = scmp.ne.s32.totalorder %s117, %s120
      %p129 = scmp.eq.s32.totalorder %s18, 1
      %p130 = por %p128, %p129
      %p131 = scmp.ne.s32.totalorder %s120, %s121
      %p132 = scmp.eq.s32.totalorder %s18, 0
      %p133 = por %p131, %p132
      %p134 = scmp.ne.s32.totalorder %s120, %s121
      %p135 = scmp.eq.s32.totalorder %s19, 1
      %p136 = por %p134, %p135
      %p138 = scmp.ne.s32.totalorder %s121, %s137
      %p139 = scmp.eq.s32.totalorder %s19, 0
      %p140 = por %p138, %p139
      %p141 = scmp.le.s32.totalorder 1, %s13
      %p142 = scmp.lt.s32.totalorder %s13, 3
      %p143 = pnand %p141, %p142
      %p144 = pneg %p143
      // Predicated region
      $region9: #{tpu_custom_call.1} parent=5 // pred_check
        _
      $region10: #{tpu_custom_call.1} parent=5 // pred_check_branch
        %146 = sbr.rel (%p143) target = $region12
      $region11: #{tpu_custom_call.1} parent=5 // pred_region
        %s147 = ssub.s32 %s13, 1
        // Predicated region
        $region13: #{tpu_custom_call.1} parent=11 // pred_check
          %p148 = pneg %p86
        $region14: #{tpu_custom_call.1} parent=11 // pred_check_branch
          %150 = sbr.rel (%p148) target = $region16
        $region15: #{tpu_custom_call.1} parent=11 // pred_region
          _
        $region16: #{tpu_custom_call.1} parent=11 // pred_fallthru
          _
        // Predicated region
        $region17: #{tpu_custom_call.1} parent=11 // pred_check
          %p151 = pneg %p107
        $region18: #{tpu_custom_call.1} parent=11 // pred_check_branch
          %153 = sbr.rel (%p151) target = $region20
        $region19: #{tpu_custom_call.1} parent=11 // pred_region
          _
        $region20: #{tpu_custom_call.1} parent=11 // pred_fallthru
          _
      $region12: #{tpu_custom_call.1} parent=5 // pred_fallthru
        _
      %p154 = scmp.lt.s32.totalorder %s13, 2
      // Predicated region
      $region21: #{tpu_custom_call.1} parent=5 // pred_check
        %p155 = pneg %p154
      $region22: #{tpu_custom_call.1} parent=5 // pred_check_branch
        %157 = sbr.rel (%p155) target = $region24
      $region23: #{tpu_custom_call.1} parent=5 // pred_region
        // Predicated region
        $region25: #{tpu_custom_call.1} parent=23 // pred_check
          %p158 = pneg %p33
        $region26: #{tpu_custom_call.1} parent=23 // pred_check_branch
          %160 = sbr.rel (%p158) target = $region28
        $region27: #{tpu_custom_call.1} parent=23 // pred_region
          %s161 = smul.u32 2, %s13
          %p162 = scmp.lt.s32.totalorder %s161, 3
          %s163 = scalar_select %p162, %s161, 3
          %s164 = smul.addr %s163, 4
          %s165 = scalar_lea.vmem %s0, %s164
          %s166 = smul.u32 2, %s13
        $region28: #{tpu_custom_call.1} parent=23 // pred_fallthru
          _
        // Predicated region
        $region29: #{tpu_custom_call.1} parent=23 // pred_check
          %p167 = pneg %p59
        $region30: #{tpu_custom_call.1} parent=23 // pred_check_branch
          %169 = sbr.rel (%p167) target = $region32
        $region31: #{tpu_custom_call.1} parent=23 // pred_region
          %s170 = smul.u32 2, %s13
          %p171 = scmp.lt.s32.totalorder %s170, 3
          %s172 = scalar_select %p171, %s170, 3
          %s173 = smul.addr %s172, 8
          %s174 = scalar_lea.vmem %s1, %s173
          %s175 = smul.u32 2, %s13
        $region32: #{tpu_custom_call.1} parent=23 // pred_fallthru
          _
      $region24: #{tpu_custom_call.1} parent=5 // pred_fallthru
        _
      %p176 = scmp.le.s32.totalorder 1, %s13
      %p177 = scmp.lt.s32.totalorder %s13, 3
      %p178 = pnand %p176, %p177
      %p179 = pneg %p178
      // Predicated region
      $region33: #{tpu_custom_call.1} parent=5 // pred_check
        _
      $region34: #{tpu_custom_call.1} parent=5 // pred_check_branch
        %181 = sbr.rel (%p178) target = $region36
      $region35: #{tpu_custom_call.1} parent=5 // pred_region
        %s182 = ssub.s32 %s13, 1
        %s183 = smul.u32 2, %s18
        %p184 = scmp.lt.s32.totalorder %s183, 3
        %s185 = scalar_select %p184, %s183, 3
        %s186 = smul.addr %s185, 4
        %s187 = scalar_lea.vmem %s0, %s186
        %p188 = pneg %p39
        %p189 = pneg %p36
        %s190 = smul.u32 2, %s18
        %p191 = scmp.lt.s32.totalorder %s190, 3
        %s192 = scalar_select %p191, %s190, 3
        %s193 = smul.addr %s192, 8
        %s194 = scalar_lea.vmem %s1, %s193
        %p195 = pneg %p65
        %p196 = pneg %p62
        %p197 = pneg %p86
        %p198 = pneg %p83
        %p199 = pneg %p107
        %p200 = pneg %p104
        %p201 = pneg %p133
        %p202 = pneg %p130
        %s203 = sand.u32 %s120, 1
        %s204 = scalar_lea.sflag [#allocation3], %s203
        %s205 = sand.u32 %s120, 1
        %s206 = smul.addr %s205, 8
        %s207 = scalar_lea.vmem [#allocation2], %s206
        %s208 = smul.u32 2, %s18
        %p209 = scmp.lt.s32.totalorder %s208, 3
        %s210 = scalar_select %p209, %s208, 3
        %s211 = smul.addr %s210, 4
        %s212 = scalar_lea.vmem %s0, %s211
        %s213 = smul.u32 2, %s18
        %s214 = smul.u32 2, %s18
        %p215 = scmp.lt.s32.totalorder %s214, 3
        %s216 = scalar_select %p215, %s214, 3
        %s217 = smul.addr %s216, 8
        %s218 = scalar_lea.vmem %s1, %s217
        %s219 = smul.u32 2, %s18
        %s220 = smul.u32 2, %s18
        %v222 = vld [vmem:[%s212] sm:$0xf]
        %v223 = vld [vmem:[%s212 + $0x4] sm:$0xf]
        %v224 = vunpack.c.l.bf16 %v222
        %v225 = vunpack.c.l.bf16 %v223
        %vm226 = vcmask 261120
        %v227 = vsel %vm226, %v224, 0.0
        %228 = vadd.xlane.f32.xlu0 %v227
        %v229 = vpop.xlane.xlu0 %228
        %v230 = vsel %vm226, %v225, 0.0
        %231 = vadd.xlane.f32.xlu0 %v230
        %v232 = vpop.xlane.xlu0 %231
        %v233 = vrcp.pop 32.0
        %v234 = vmul.f32 %v229, %v233
        %v235 = vmul.f32 %v232, %v233
        %v236 = vsub.f32 %v224, %v234
        %v237 = vsub.f32 %v225, %v235
        %v238 = vmul.f32 %v236, %v236
        %v239 = vmul.f32 %v237, %v237
        %v240 = vsel %vm226, %v238, 0.0
        %241 = vadd.xlane.f32.xlu0 %v240
        %v242 = vpop.xlane.xlu0 %241
        %v243 = vsel %vm226, %v239, 0.0
        %244 = vadd.xlane.f32.xlu0 %v243
        %v245 = vpop.xlane.xlu0 %244
        %v246 = vmul.f32 %v242, %v233
        %v247 = vmul.f32 %v245, %v233
        %v248 = vadd.f32 %v246, 1e-12
        %v249 = vadd.f32 %v247, 1e-12
        %v250 = vrsqrt.pop %v248
        %v251 = vrsqrt.pop %v249
        %v252 = vmul.f32 %v236, %v250
        %v253 = vmul.f32 %v237, %v251
        %v254 = vld [vmem:[%s218] sm:$0xff]
        %v255 = vld [vmem:[%s218 + $0x8] sm:$0xff]
        %257 = vset.pattern.permute.xlu0 0
        %258 = vperm.xlu0 %257, %v254
        %v259 = vpop.permute.xlu0 %258
        %262 = vset.pattern.permute.xlu0 0
        %263 = vperm.xlu0 %262, %v255
        %v264 = vpop.permute.xlu0 %263
        %v266 = vmul.f32 %v252, %v259
        %v267 = vmul.f32 %v253, %v264
        %v268 = vpack.c.bf16 %v267, %v266
        %v269 = vld [vmem:[%s2] sm:$0xf]
        %v270 = vld [vmem:[%s2 + $0x4] sm:$0xf]
        %v271 = vld [vmem:[%s2 + $0x8] sm:$0xf]
        %v272 = vld [vmem:[%s2 + $0xc] sm:$0xf]
        %v273 = vld [vmem:[%s3] sm:$0x1]
        %v275 = vlaneseq
        %v276 = vshrl.u32 %v275, 7
        %v277 = vsub.s32 0, %v276
        %v278 = vrot.slane %v273, %v277
        %v284 = vunpack.c.l.b16 %v269
        %v285 = vunpack.c.l.b16 %v270
        %v286 = vunpack.c.l.b16 %v271
        %v287 = vunpack.c.l.b16 %v272
        %v288 = vpack.c.b16 %v285, %v284
        %v289 = vpack.c.b16 %v287, %v286
        %v293 = vsel %vm226, %v268, 0
        %295 = vmatprep.subr.bf16.mxu0 0
        %296 = vmatpush1.bf16.msra.mxu0 0
        %297 = vmatprep.subr.bf16.mxu0 0
        %298 = vmatpush1.bf16.msra.mxu0 0
        %299 = vmatprep.subr.bf16.mxu0 0
        %300 = vmatpush1.bf16.msra.mxu0 0
        %301 = vmatprep.subr.bf16.mxu0 0
        %302 = vmatpush1.bf16.msra.mxu0 0
        %303 = vmatprep.subr.bf16.mxu0 0
        %304 = vmatpush1.bf16.msra.mxu0 0
        %305 = vmatprep.subr.bf16.mxu0 0
        %306 = vmatpush1.bf16.msra.mxu0 0
        %307 = vmatprep.subr.bf16.mxu0 0
        %308 = vmatpush1.bf16.msra.mxu0 %v289
        %309 = vmatprep.subr.bf16.mxu0 0
        %310 = vmatpush1.bf16.msra.mxu0 %v288
        %311 = vmatprep.subr.bf16.mxu0 0
        %312 = vmatpush2.bf16.msra.mxu0 0
        %313 = vmatprep.subr.bf16.mxu0 0
        %314 = vmatpush2.bf16.msra.mxu0 0
        %315 = vmatprep.subr.bf16.mxu0 0
        %316 = vmatpush2.bf16.msra.mxu0 0
        %317 = vmatprep.subr.bf16.mxu0 0
        %318 = vmatpush2.bf16.msra.mxu0 0
        %319 = vmatprep.subr.bf16.mxu0 0
        %320 = vmatpush2.bf16.msra.mxu0 0
        %321 = vmatprep.subr.bf16.mxu0 0
        %322 = vmatpush2.bf16.msra.mxu0 0
        %323 = vmatprep.subr.bf16.mxu0 0
        %324 = vmatpush2.bf16.msra.mxu0 0
        %325 = vmatprep.subr.bf16.mxu0 0
        %326 = vmatpush2.bf16.msra.mxu0 0
        %327 = vmatprep.mubr.bf16.mxu0 0
        %328 = vmatmul.mubr.bf16.gmra.mxu0 %v293
        %v329 = vpop.f32.mrf.mxu0
        %v330 = vadd.f32 %v278, %v329
        %v331 = vpop.f32.mrf.mxu0
        %v332 = vpop.f32.mrf.mxu0
        %v333 = vadd.f32 %v278, %v332
        %v334 = vpop.f32.mrf.mxu0
        %335 = vdwg.mxu0
        %v336 = vlaneseq
        %v337 = vand.u32 %v336, 127
        %vm338 = vcmp.ge.s32.totalorder %v337, 12
        %vm339 = vcmp.lt.s32.totalorder %v337, 17
        %vm340 = vmand %vm338, %vm339
        %vm341 = vcmp.ne.f32.partialorder %v254, 1.0
        %vm342 = vcmp.ne.f32.partialorder %v255, 1.0
        %v343 = vsel %vm340, 1, 0
        %vm344 = vcmp.eq.s32.totalorder %v343, 1
        %v345 = vsel %vm341, 1, 0
        %v346 = vsel %vm342, 1, 0
        %347 = vset.pattern.permute.xlu0 1
        %348 = vperm.xlu0 %347, %v345
        %v349 = vpop.permute.xlu0 %348
        %350 = vset.pattern.permute.xlu0 1
        %351 = vperm.xlu0 %350, %v346
        %v352 = vpop.permute.xlu0 %351
        %vm353 = vcmp.eq.s32.totalorder %v349, 1
        %vm354 = vcmp.eq.s32.totalorder %v352, 1
        %vm355 = vmand %vm344, %vm353
        %vm356 = vmand %vm344, %vm354
        %357 = vset.pattern.permute.xlu0 1
        %358 = vperm.xlu0 %357, %v254
        %v359 = vpop.permute.xlu0 %358
        %361 = vset.pattern.permute.xlu0 1
        %362 = vperm.xlu0 %361, %v255
        %v363 = vpop.permute.xlu0 %362
        %v365 = vsel %vm355, %v359, %v330
        %v366 = vsel %vm356, %v363, %v333
        %v367 = vpack.c.bf16 %v366, %v365
        %v369 = vunpack.c.l.b16 %v367
        %v370 = vunpack.c.h.b16 %v367
        %v371 = vpack.c.b16 %v369, %v369
        %v372 = vpack.c.b16 %v370, %v370
        %375 = vst [vmem:[%s207] sm:$0xf] %v371
        %376 = vst [vmem:[%s207 + $0x4] sm:$0xf] %v372
        %s377 = sand.u32 %s120, 1
        %s378 = scalar_lea.sflag [#allocation3], %s377
        %s379 = sand.u32 %s120, 1
        %s380 = smul.addr %s379, 8
        %s381 = scalar_lea.vmem [#allocation2], %s380
        // Predicated region
        $region37: #{tpu_custom_call.1} parent=35 // pred_check
          %p382 = pneg %p130
        $region38: #{tpu_custom_call.1} parent=35 // pred_check_branch
          %384 = sbr.rel (%p382) target = $region40
        $region39: #{tpu_custom_call.1} parent=35 // pred_region
          %s385 = smul.u32 2, %s18
          %s387 = ssub.s32 128, 128
          %388 = vsyncadd %s378, %s387
          %s389 = smul.addr %s385, 64
          %s390 = scalar_lea.hbm %s4, %s389
          %s391 = sshll.u32 %s381, 4
          %s392 = int_to_ptr.vmem [resolvable:$true] %s391
          %397 = dma.vmem_to_hbm [thread:$0]  %s392, 128, %s390, %s378, 64, 64, 4
        $region40: #{tpu_custom_call.1} parent=35 // pred_fallthru
          _
      $region36: #{tpu_custom_call.1} parent=5 // pred_fallthru
        _
      %p398 = scmp.le.s32.totalorder 2, %s13
      // Predicated region
      $region41: #{tpu_custom_call.1} parent=5 // pred_check
        %p399 = pneg %p398
      $region42: #{tpu_custom_call.1} parent=5 // pred_check_branch
        %401 = sbr.rel (%p399) target = $region44
      $region43: #{tpu_custom_call.1} parent=5 // pred_region
        %s402 = ssub.s32 %s13, 2
        // Predicated region
        $region45: #{tpu_custom_call.1} parent=43 // pred_check
          %p403 = pneg %p136
        $region46: #{tpu_custom_call.1} parent=43 // pred_check_branch
          %405 = sbr.rel (%p403) target = $region48
        $region47: #{tpu_custom_call.1} parent=43 // pred_region
          %s406 = sand.u32 %s121, 1
          %s407 = scalar_lea.sflag [#allocation3], %s406
          %s408 = sand.u32 %s121, 1
          %s409 = smul.addr %s408, 8
          %s410 = scalar_lea.vmem [#allocation2], %s409
          %411 = dma.done %s407, 128
        $region48: #{tpu_custom_call.1} parent=43 // pred_fallthru
          _
      $region44: #{tpu_custom_call.1} parent=5 // pred_fallthru
        _
    $region6: #{tpu_custom_call.1} parent=1 // loop_footer
      %s17 = sadd.s32 1, %s13
    $region7: #{tpu_custom_call.1} parent=1 // loop_footer_branch
      %12 = sbr.rel target = $region3
    $region8: #{tpu_custom_call.1} parent=1 // loop_exit
      _
    %412 = vsyncpa [#allocation3], 1
    %s413 = scalar_lea.sflag [#allocation3], 1
    %414 = vsyncpa %s413, 1

</llo_original>
